<compile_context>
chip_gen: v6e
topology: v6e:2x2x1
jax: 0.10.0
libtpu: 0.0.40
codegen_flags: <defaults>
</compile_context>

<pallas_src>
import functools

import jax
import jax.numpy as jnp
from jax import lax
from jax.experimental import pallas as pl
from jax.experimental.pallas import tpu as pltpu

_LANE = 128


# ----------------------------------------------------------------------------
# Small helpers: padding-aware footprints and tile choosers
# ----------------------------------------------------------------------------
def _round_up(a, m):
    return ((a + m - 1) // m) * m


def _sublane(itemsize):
    return {4: 8, 2: 16, 1: 32}.get(itemsize, 8)


def _divisors_desc(n):
    out = set()
    i = 1
    while i * i <= n:
        if n % i == 0:
            out.add(i)
            out.add(n // i)
        i += 1
    return sorted(out, reverse=True)


def _block_bytes(bb, rows, cols, itemsize):
    """Padded VMEM footprint of one (bb, rows, cols) tile (lane/sublane padding)."""
    return (bb * _round_up(max(rows, 1), _sublane(itemsize))
            * _round_up(max(cols, 1), _LANE) * itemsize)


def _physical_vmem_bytes():
    try:
        info = pltpu.get_tpu_info()
        v = getattr(info, "vmem_capacity_bytes", None)
        if v:
            return int(v)
    except Exception:
        pass
    return 64 * 1024 * 1024      # assume the smallest case (v7x, per TensorCore)


def _vmem_plan(target_block_bytes):
    phys = _physical_vmem_bytes()
    vmem_limit = min(64 << 20, int(phys * 3 // 4))       # 48 MiB on v7x, 64 MiB on v5e/v6e
    budget = max(vmem_limit - (8 << 20), 8 << 20)        # working-set budget w/ headroom
    if target_block_bytes is None:
        target_block_bytes = max(512 * 1024, min(4 << 20, budget // 8))
    return vmem_limit, budget, target_block_bytes


def _choose_fold(L, C, itemsize):
    """Power-of-two k (dividing L) for the lane-dense [B, L//k, k*C] layout."""
    if C >= _LANE:
        return 1
    sub = _sublane(itemsize)
    best_k, best_key = 1, None
    k = 1
    while L % k == 0 and k * C <= 512:
        cost = _round_up(L // k, sub) * _round_up(k * C, _LANE)
        key = (cost, 0 if (k * C) % _LANE == 0 else 1, -k)
        if best_key is None or key < best_key:
            best_key, best_k = key, k
        k *= 2
    return best_k


def _choose_tc(CC, rows, itemsize, target):
    """Feature tile: a 128-multiple divisor of CC, or CC itself."""
    if CC % _LANE != 0 or CC <= _LANE:
        return CC
    cands = [d for d in _divisors_desc(CC) if d % _LANE == 0]
    for d in cands:
        if _block_bytes(1, rows, d, itemsize) <= target:
            return d
    return cands[-1]


def _choose_tl(Lb, fits):
    """Largest L tile (divisor of Lb, full or multiple of 8) accepted by fits()."""
    cands = [d for d in _divisors_desc(Lb) if d == Lb or d % 8 == 0]
    for d in cands:
        if fits(d):
            return d
    return cands[-1]


def _choose_bb(B, fits_budget, fits_target):
    cands = [d for d in _divisors_desc(B) if fits_budget(d)]
    if not cands:
        return 1
    for d in cands:
        if fits_target(d):
            return d
    return 1


def _fused_vmem(bb, Lb, tc, itemsize, stats_w, fold):
    io = 2 * 2 * _block_bytes(bb, Lb, tc, itemsize)            # x & y, double-buffered
    tmp = (3 if itemsize == 4 else 4) * _block_bytes(bb, Lb, tc, 4)
    stats = 2 * 2 * _block_bytes(bb, 1, stats_w, 4)
    params = 2 * 2 * _block_bytes(1, 1, tc, 4)
    gmat = _block_bytes(1, _round_up(tc, _LANE), tc, 4) if fold > 1 else 0
    return io + tmp + stats + params + gmat + (1 << 20)


def _apply_vmem(bb, tl, tc, itemsize, ncoef):
    io = 2 * 2 * _block_bytes(bb, tl, tc, itemsize)
    tmp = (2 if itemsize == 4 else 3) * _block_bytes(bb, tl, tc, 4)
    coef = ncoef * 2 * _block_bytes(bb, 1, tc, 4)
    return io + tmp + coef + (1 << 20)


def _stats_vmem(bb, tl, tc, itemsize):
    xin = 2 * _block_bytes(bb, tl, tc, itemsize)
    tmp = 2 * _block_bytes(bb, tl, tc, 4)
    acc = 2 * 2 * _block_bytes(bb, 1, tc, 4)
    return xin + tmp + acc + (1 << 20)


# ----------------------------------------------------------------------------
# Kernels
# ----------------------------------------------------------------------------
def _revin_norm_fused_kernel(x_ref, w_ref, b_ref, y_ref, mean_ref, stdev_ref,
                             *, eps, fold, stats_width, seq_len):
    """Single-pass statistics + normalize over one (bb, Lb, kc) block.

    When fold > 1 the lane axis packs `fold` consecutive timesteps of all
    `stats_width` features (lane j = r*C + c).  Per-feature stats are
    recovered — and broadcast back to every lane — with a tiny group-sum
    matmul against gmat[j, j'] = [j % C == j' % C].
    """
    x = x_ref[...].astype(jnp.float32)                        # (bb, Lb, kc)
    inv_n = 1.0 / float(seq_len)

    part_sum = jnp.sum(x, axis=1)                             # (bb, kc)
    if fold > 1:
        kc = x.shape[2]
        row = lax.broadcasted_iota(jnp.int32, (kc, kc), 0)
        col = lax.broadcasted_iota(jnp.int32, (kc, kc), 1)
        gmat = (row % stats_width == col % stats_width).astype(jnp.float32)
        mean_l = jnp.dot(part_sum, gmat,
                         preferred_element_type=jnp.float32) * inv_n
    else:
        mean_l = part_sum * inv_n

    centered = x - mean_l[:, None, :]
    part_sq = jnp.sum(centered * centered, axis=1)            # (bb, kc)
    if fold > 1:
        var_l = jnp.dot(part_sq, gmat,
                        preferred_element_type=jnp.float32) * inv_n
    else:
        var_l = part_sq * inv_n

    inv_std = lax.rsqrt(var_l + eps)                          # one EUP rsqrt, no divide
    stdev_l = (var_l + eps) * inv_std                         # == sqrt(var + eps)

    scale = inv_std * w_ref[...]                              # (bb, kc)
    shift = b_ref[...]                                        # (1, kc)
    # Centered form: avoids x*scale - mean*scale cancellation for large means.
    y_ref[...] = (centered * scale[:, None, :]
                  + shift[:, None, :]).astype(y_ref.dtype)

    mean_c = mean_l[:, :stats_width]
    stdev_c = stdev_l[:, :stats_width]
    mean_ref[...] = mean_c[:, None, :]
    stdev_ref[...] = stdev_c[:, None, :]


def _revin_stats_kernel(x_ref, sum_ref, sumsq_ref):
    """L-tiled fallback: accumulate per-lane sum / sum-of-squares across the
    (arbitrary) L grid axis; outputs stay resident in VMEM as accumulators."""
    @pl.when(pl.program_id(2) == 0)
    def _():
        sum_ref[...] = jnp.zeros_like(sum_ref)
        sumsq_ref[...] = jnp.zeros_like(sumsq_ref)

    x = x_ref[...].astype(jnp.float32)
    sum_ref[...] += jnp.sum(x, axis=1, keepdims=True)
    sumsq_ref[...] += jnp.sum(x * x, axis=1, keepdims=True)


def _apply_affine_kernel(*refs, centered):
    """y = (x - c) * s + t  (c omitted when centered=False); c/s/t are (bb,1,tc)."""
    if centered:
        x_ref, c_ref, s_ref, t_ref, y_ref = refs
    else:
        x_ref, s_ref, t_ref, y_ref = refs
    x = x_ref[...].astype(jnp.float32)
    if centered:
        x = x - c_ref[...]
    y_ref[...] = (x * s_ref[...] + t_ref[...]).astype(y_ref.dtype)


# ----------------------------------------------------------------------------
# Elementwise (denorm / fallback-normalize) dispatcher
# ----------------------------------------------------------------------------
def _apply_elementwise(xr, coeffs, *, centered, vmem_limit, budget, target):
    """Elementwise (x [- c]) * s + t over xr of shape (B, Lb, CC).
    coeffs are (B, 1, CC) float32 arrays already tiled to the lane-dense width."""
    B, Lb, CC = xr.shape
    itemsize = jnp.dtype(xr.dtype).itemsize
    ncoef = len(coeffs)

    tc = _choose_tc(CC, Lb, itemsize, target)
    tl = _choose_tl(Lb, lambda d: (_apply_vmem(1, d, tc, itemsize, ncoef) <= budget
                                   and _block_bytes(1, d, tc, itemsize) <= target))
    bb = _choose_bb(
        B,
        lambda d: _apply_vmem(d, tl, tc, itemsize, ncoef) <= budget,
        lambda d: _block_bytes(d, tl, tc, itemsize) <= target)
    # Keep at least 2 grid steps (v7x: 2 TensorCores) when possible.
    if (B // bb) * (CC // tc) * (Lb // tl) < 2 and B >= 2:
        smaller = [d for d in _divisors_desc(B)
                   if d <= B // 2 and _apply_vmem(d, tl, tc, itemsize, ncoef) <= budget]
        if smaller:
            bb = smaller[0]

    grid = (B // bb, CC // tc, Lb // tl)
    x_spec = pl.BlockSpec((bb, tl, tc), lambda i, j, l: (i, l, j))
    c_spec = pl.BlockSpec((bb, 1, tc), lambda i, j, l: (i, 0, j))

    return pl.pallas_call(
        functools.partial(_apply_affine_kernel, centered=centered),
        out_shape=jax.ShapeDtypeStruct((B, Lb, CC), xr.dtype),
        grid=grid,
        in_specs=[x_spec] + [c_spec] * ncoef,
        out_specs=x_spec,
        compiler_params=pltpu.CompilerParams(
            dimension_semantics=("parallel", "parallel", "parallel"),
            vmem_limit_bytes=vmem_limit),
    )(xr, *coeffs)


# ----------------------------------------------------------------------------
# Public wrappers
# ----------------------------------------------------------------------------
def revin_norm(x, affine_weight=None, affine_bias=None, *, eps=1e-5, affine=True,
               target_block_bytes=None, force_two_pass=False):
    """RevIN mode='norm'.  Returns (y, mean, stdev); mean/stdev (float32,
    shape (B, 1, C)) are the stored statistics needed later for 'denorm'."""
    B, L, C = x.shape
    itemsize = jnp.dtype(x.dtype).itemsize
    vmem_limit, budget, target = _vmem_plan(target_block_bytes)

    fold = _choose_fold(L, C, itemsize)
    Lb, CC = L // fold, fold * C
    xr = x.reshape(B, Lb, CC)                      # contiguous -> free reshape

    w = (affine_weight if (affine and affine_weight is not None)
         else jnp.ones((C,), jnp.float32))
    b = (affine_bias if (affine and affine_bias is not None)
         else jnp.zeros((C,), jnp.float32))
    w32 = jnp.asarray(w, jnp.float32).reshape(1, C)
    b32 = jnp.asarray(b, jnp.float32).reshape(1, C)
    w_eff = jnp.tile(w32, (1, fold))               # (1, CC), lane-tiled
    b_eff = jnp.tile(b32, (1, fold))

    tc = CC if fold > 1 else _choose_tc(CC, Lb, itemsize, target)
    stats_w = C if fold > 1 else tc
    fused_fits = _fused_vmem(1, Lb, tc, itemsize, stats_w, fold) <= budget

    if fused_fits and not force_two_pass:
        nc = CC // tc
        bb = _choose_bb(
            B,
            lambda d: _fused_vmem(d, Lb, tc, itemsize, stats_w, fold) <= budget,
            lambda d: _block_bytes(d, Lb, tc, itemsize) <= target)
        if (B // bb) * nc < 2 and B >= 2:
            smaller = [d for d in _divisors_desc(B)
                       if d <= B // 2
                       and _fused_vmem(d, Lb, tc, itemsize, stats_w, fold) <= budget]
            if smaller:
                bb = smaller[0]
        grid = (B // bb, nc)

        kern = functools.partial(_revin_norm_fused_kernel, eps=float(eps),
                                 fold=fold, stats_width=stats_w, seq_len=L)
        x_spec = pl.BlockSpec((bb, Lb, tc), lambda i, j: (i, 0, j))
        s_spec = pl.BlockSpec((bb, 1, stats_w), lambda i, j: (i, 0, j))
        p_spec = pl.BlockSpec((1, tc), lambda i, j: (0, j))

        yr, mean, stdev = pl.pallas_call(
            kern,
            out_shape=(jax.ShapeDtypeStruct((B, Lb, CC), x.dtype),
                       jax.ShapeDtypeStruct((B, 1, C), jnp.float32),
                       jax.ShapeDtypeStruct((B, 1, C), jnp.float32)),
            grid=grid,
            in_specs=[x_spec, p_spec, p_spec],
            out_specs=(x_spec, s_spec, s_spec),
            compiler_params=pltpu.CompilerParams(
                dimension_semantics=("parallel", "parallel"),
                vmem_limit_bytes=vmem_limit),
        )(xr, w_eff, b_eff)
        return yr.reshape(B, L, C), mean, stdev

    # ------------- two-pass fallback: L-tiled stats, then normalize ----------
    # TODO(synk): stats use the E[x^2]-mean^2 form here; acceptable for the
    # long-L fallback but slightly less robust than the fused two-pass variance.
    tl_s = _choose_tl(Lb, lambda d: (_stats_vmem(1, d, tc, itemsize) <= budget
                                     and _block_bytes(1, d, tc, itemsize) <= target))
    bb_s = _choose_bb(
        B,
        lambda d: _stats_vmem(d, tl_s, tc, itemsize) <= budget,
        lambda d: _block_bytes(d, tl_s, tc, itemsize) <= target)
    x_spec = pl.BlockSpec((bb_s, tl_s, tc), lambda i, j, l: (i, l, j))
    a_spec = pl.BlockSpec((bb_s, 1, tc), lambda i, j, l: (i, 0, j))

    sums, sumsq = pl.pallas_call(
        _revin_stats_kernel,
        out_shape=(jax.ShapeDtypeStruct((B, 1, CC), jnp.float32),
                   jax.ShapeDtypeStruct((B, 1, CC), jnp.float32)),
        grid=(B // bb_s, CC // tc, Lb // tl_s),
        in_specs=[x_spec],
        out_specs=(a_spec, a_spec),
        compiler_params=pltpu.CompilerParams(
            dimension_semantics=("parallel", "parallel", "arbitrary"),
            vmem_limit_bytes=vmem_limit),
    )(xr)

    # Fold the `fold` lane sub-groups back to per-feature stats (tiny arrays).
    s = sums.reshape(B, fold, C).sum(axis=1)
    q = sumsq.reshape(B, fold, C).sum(axis=1)
    mean = s / L
    var = jnp.maximum(q / L - mean * mean, 0.0)
    stdev = jnp.sqrt(var + eps)
    scale = w32 * lax.rsqrt(var + eps)                        # (B, C): w / stdev

    center_t = jnp.tile(mean, (1, fold)).reshape(B, 1, CC)
    scale_t = jnp.tile(scale, (1, fold)).reshape(B, 1, CC)
    shift_t = jnp.tile(jnp.broadcast_to(b32, (B, C)), (1, fold)).reshape(B, 1, CC)

    yr = _apply_elementwise(xr, (center_t, scale_t, shift_t), centered=True,
                            vmem_limit=vmem_limit, budget=budget, target=target)
    return (yr.reshape(B, L, C),
            mean.reshape(B, 1, C).astype(jnp.float32),
            stdev.reshape(B, 1, C).astype(jnp.float32))


def revin_denorm(x, mean, stdev, affine_weight=None, affine_bias=None, *,
                 eps=1e-5, affine=True, target_block_bytes=None):
    """RevIN mode='denorm', using statistics produced by revin_norm."""
    B, L, C = x.shape
    itemsize = jnp.dtype(x.dtype).itemsize
    vmem_limit, budget, target = _vmem_plan(target_block_bytes)

    fold = _choose_fold(L, C, itemsize)
    Lb, CC = L // fold, fold * C
    xr = x.reshape(B, Lb, CC)

    mean32 = jnp.asarray(mean, jnp.float32).reshape(B, C)
    stdev32 = jnp.asarray(stdev, jnp.float32).reshape(B, C)
    if affine and affine_weight is not None and affine_bias is not None:
        w32 = jnp.asarray(affine_weight, jnp.float32).reshape(1, C)
        b32 = jnp.asarray(affine_bias, jnp.float32).reshape(1, C)
        scale = stdev32 / (w32 + eps * eps)        # matches PyTorch denorm exactly
        shift = mean32 - b32 * scale
    else:
        scale = stdev32
        shift = mean32
    scale_t = jnp.tile(scale, (1, fold)).reshape(B, 1, CC)
    shift_t = jnp.tile(shift, (1, fold)).reshape(B, 1, CC)

    yr = _apply_elementwise(xr, (scale_t, shift_t), centered=False,
                            vmem_limit=vmem_limit, budget=budget, target=target)
    return yr.reshape(B, L, C)


# ----------------------------------------------------------------------------
# Demo / self-check
# ----------------------------------------------------------------------------
def _ref_norm(x, w, b, eps):
    m = jnp.mean(x, axis=1, keepdims=True)
    v = jnp.mean((x - m) ** 2, axis=1, keepdims=True)
    s = jnp.sqrt(v + eps)
    return (x - m) / s * w + b, m, s


if __name__ == "__main__":
    eps = 1e-5
    key = jax.random.PRNGKey(0)
    k1, k2, k3, k4, k5, k6 = jax.random.split(key, 6)

    def check(name, got, want, atol=1e-4, rtol=1e-4):
        ok = jnp.allclose(got, want, atol=atol, rtol=rtol)
        assert bool(ok), f"{name}: max err {jnp.max(jnp.abs(got - want))}"

    # ---- test 1: module-scale shape (B=2, L=8, C=4), default affine params --
    B, L, C = 2, 8, 4
    x = jax.random.normal(k1, (B, L, C), jnp.float32) * 3.0 + 1.5
    w = jnp.ones((C,), jnp.float32)           # RevIN._init_params
    b = jnp.zeros((C,), jnp.float32)
    y, mean, stdev = revin_norm(x, w, b, eps=eps)
    y = jax.block_until_ready(y)
    ry, rm, rs = _ref_norm(x, w, b, eps)
    check("t1 y", y, ry); check("t1 mean", mean, rm); check("t1 stdev", stdev, rs)
    xrec = jax.block_until_ready(revin_denorm(y, mean, stdev, w, b, eps=eps))
    check("t1 roundtrip", xrec, x)

    # ---- test 2: lane-dense fold path (C=7 << 128), random affine -----------
    B, L, C = 4, 96, 7
    x = jax.random.normal(k2, (B, L, C), jnp.float32) * 2.0 - 0.7
    w = jax.random.uniform(k3, (C,), jnp.float32, minval=0.5, maxval=1.5)
    b = jax.random.normal(k4, (C,), jnp.float32) * 0.1
    y, mean, stdev = revin_norm(x, w, b, eps=eps)
    y = jax.block_until_ready(y)
    ry, rm, rs = _ref_norm(x, w, b, eps)
    check("t2 y", y, ry); check("t2 mean", mean, rm); check("t2 stdev", stdev, rs)
    xrec = jax.block_until_ready(revin_denorm(y, mean, stdev, w, b, eps=eps))
    check("t2 roundtrip", xrec, x)

    # ---- test 3: feature-tiled path (C=256) with a small block target -------
    B, L, C = 4, 16, 256
    x = jax.random.normal(k5, (B, L, C), jnp.float32) * 1.3 + 0.25
    w = jnp.ones((C,), jnp.float32)
    b = jnp.zeros((C,), jnp.float32)
    y, mean, stdev = revin_norm(x, w, b, eps=eps, target_block_bytes=8192)
    y = jax.block_until_ready(y)
    ry, rm, rs = _ref_norm(x, w, b, eps)
    check("t3 y", y, ry); check("t3 mean", mean, rm); check("t3 stdev", stdev, rs)
    xrec = jax.block_until_ready(
        revin_denorm(y, mean, stdev, w, b, eps=eps, target_block_bytes=8192))
    check("t3 roundtrip", xrec, x)

    # ---- test 4: forced two-pass (L-tiled) fallback --------------------------
    B, L, C = 2, 1024, 128
    x = jax.random.normal(k6, (B, L, C), jnp.float32) * 2.0 + 0.5
    w = jnp.ones((C,), jnp.float32)
    b = jnp.zeros((C,), jnp.float32)
    y, mean, stdev = revin_norm(x, w, b, eps=eps, force_two_pass=True,
                                target_block_bytes=8192)
    y = jax.block_until_ready(y)
    ry, rm, rs = _ref_norm(x, w, b, eps)
    check("t4 y", y, ry, atol=5e-4, rtol=5e-4)
    check("t4 mean", mean, rm)
    check("t4 stdev", stdev, rs, atol=5e-4, rtol=5e-4)
    xrec = jax.block_until_ready(
        revin_denorm(y, mean, stdev, w, b, eps=eps, target_block_bytes=8192))
    check("t4 roundtrip", xrec, x, atol=5e-4, rtol=5e-4)

    print("KERNEL_OK")
</pallas_src>

<mosaic_0001>
module attributes {stable_mosaic.version = 11 : i64} {
  func.func @_revin_norm_fused_kernel(%arg0: i32, %arg1: i32, %arg2: memref<1x1x32xf32, #tpu.memory_space<vmem>>, %arg3: memref<1x32xf32, #tpu.memory_space<vmem>>, %arg4: memref<1x32xf32, #tpu.memory_space<vmem>>, %arg5: memref<1x1x32xf32, #tpu.memory_space<vmem>>, %arg6: memref<1x1x4xf32, #tpu.memory_space<vmem>>, %arg7: memref<1x1x4xf32, #tpu.memory_space<vmem>>) attributes {dimension_semantics = [#tpu.dimension_semantics<parallel>, #tpu.dimension_semantics<parallel>], iteration_bounds = array<i64: 2, 1>, scalar_prefetch = 0 : i64, scratch_operands = 0 : i64, tpu.core_type = #tpu.core_type<tc>, window_params = [{transform_indices = @transform_0, window_bounds = array<i64: 1, 1, 32>}, {transform_indices = @transform_1, window_bounds = array<i64: 1, 32>}, {transform_indices = @transform_2, window_bounds = array<i64: 1, 32>}, {transform_indices = @transform_3, window_bounds = array<i64: 1, 1, 32>}, {transform_indices = @transform_4, window_bounds = array<i64: 1, 1, 4>}, {transform_indices = @transform_5, window_bounds = array<i64: 1, 1, 4>}]} {
    %c0 = arith.constant 0 : index
    %c0_0 = arith.constant 0 : index
    %c0_1 = arith.constant 0 : index
    %0 = vector.load %arg2[%c0, %c0_0, %c0_1] : memref<1x1x32xf32, #tpu.memory_space<vmem>>, vector<1x1x32xf32>
    %cst = arith.constant dense<0.000000e+00> : vector<1x32xf32>
    %1 = vector.multi_reduction <add>, %0, %cst [1] : vector<1x1x32xf32> to vector<1x32xf32>
    %2 = tpu.iota {dimensions = array<i32: 0>} : vector<32x32xi32>
    %3 = tpu.iota {dimensions = array<i32: 1>} : vector<32x32xi32>
    %c4_i32 = arith.constant 4 : i32
    %c0_i32 = arith.constant 0 : i32
    %4 = arith.cmpi eq, %c4_i32, %c0_i32 : i32
    %c1_i32 = arith.constant 1 : i32
    %5 = arith.select %4, %c1_i32, %c4_i32 : i32
    %6 = vector.broadcast %5 : i32 to vector<32x32xi32>
    %7 = arith.remsi %2, %6 : vector<32x32xi32>
    %c0_i32_2 = arith.constant 0 : i32
    %8 = vector.broadcast %c0_i32_2 : i32 to vector<32x32xi32>
    %9 = arith.cmpi ne, %7, %8 : vector<32x32xi32>
    %c0_i32_3 = arith.constant 0 : i32
    %10 = vector.broadcast %c0_i32_3 : i32 to vector<32x32xi32>
    %11 = arith.cmpi slt, %7, %10 : vector<32x32xi32>
    %c0_i32_4 = arith.constant 0 : i32
    %12 = arith.cmpi slt, %5, %c0_i32_4 : i32
    %13 = vector.broadcast %12 : i1 to vector<32x32xi1>
    %14 = vector.broadcast %13 : vector<32x32xi1> to vector<32x32xi1>
    %15 = arith.xori %11, %14 : vector<32x32xi1>
    %16 = arith.andi %15, %9 : vector<32x32xi1>
    %17 = vector.broadcast %5 : i32 to vector<32x32xi32>
    %18 = arith.addi %7, %17 : vector<32x32xi32>
    %19 = arith.select %16, %18, %7 : vector<32x32xi1>, vector<32x32xi32>
    %c4_i32_5 = arith.constant 4 : i32
    %c0_i32_6 = arith.constant 0 : i32
    %20 = arith.cmpi eq, %c4_i32_5, %c0_i32_6 : i32
    %c1_i32_7 = arith.constant 1 : i32
    %21 = arith.select %20, %c1_i32_7, %c4_i32_5 : i32
    %22 = vector.broadcast %21 : i32 to vector<32x32xi32>
    %23 = arith.remsi %3, %22 : vector<32x32xi32>
    %c0_i32_8 = arith.constant 0 : i32
    %24 = vector.broadcast %c0_i32_8 : i32 to vector<32x32xi32>
    %25 = arith.cmpi ne, %23, %24 : vector<32x32xi32>
    %c0_i32_9 = arith.constant 0 : i32
    %26 = vector.broadcast %c0_i32_9 : i32 to vector<32x32xi32>
    %27 = arith.cmpi slt, %23, %26 : vector<32x32xi32>
    %c0_i32_10 = arith.constant 0 : i32
    %28 = arith.cmpi slt, %21, %c0_i32_10 : i32
    %29 = vector.broadcast %28 : i1 to vector<32x32xi1>
    %30 = vector.broadcast %29 : vector<32x32xi1> to vector<32x32xi1>
    %31 = arith.xori %27, %30 : vector<32x32xi1>
    %32 = arith.andi %31, %25 : vector<32x32xi1>
    %33 = vector.broadcast %21 : i32 to vector<32x32xi32>
    %34 = arith.addi %23, %33 : vector<32x32xi32>
    %35 = arith.select %32, %34, %23 : vector<32x32xi1>, vector<32x32xi32>
    %36 = arith.cmpi eq, %19, %35 : vector<32x32xi32>
    %37 = arith.extui %36 : vector<32x32xi1> to vector<32x32xi32>
    %38 = arith.sitofp %37 : vector<32x32xi32> to vector<32x32xf32>
    %cst_11 = arith.constant dense<0.000000e+00> : vector<1x32xf32>
    %39 = tpu.matmul %1, %38, %cst_11 {dimension_numbers = #tpu.dot_dimension_numbers<[1], [0], [0], [1], [0, 0, 1, 1], [], []>} : vector<1x32xf32>, vector<32x32xf32>, vector<1x32xf32> -> vector<1x32xf32>
    %cst_12 = arith.constant 1.250000e-01 : f32
    %40 = vector.broadcast %cst_12 : f32 to vector<1x32xf32>
    %41 = arith.mulf %39, %40 : vector<1x32xf32>
    %42 = vector.shape_cast %41 : vector<1x32xf32> to vector<1x1x32xf32>
    %43 = arith.subf %0, %42 : vector<1x1x32xf32>
    %44 = arith.mulf %43, %43 : vector<1x1x32xf32>
    %cst_13 = arith.constant dense<0.000000e+00> : vector<1x32xf32>
    %45 = vector.multi_reduction <add>, %44, %cst_13 [1] : vector<1x1x32xf32> to vector<1x32xf32>
    %cst_14 = arith.constant dense<0.000000e+00> : vector<1x32xf32>
    %46 = tpu.matmul %45, %38, %cst_14 {dimension_numbers = #tpu.dot_dimension_numbers<[1], [0], [0], [1], [0, 0, 1, 1], [], []>} : vector<1x32xf32>, vector<32x32xf32>, vector<1x32xf32> -> vector<1x32xf32>
    %cst_15 = arith.constant 1.250000e-01 : f32
    %47 = vector.broadcast %cst_15 : f32 to vector<1x32xf32>
    %48 = arith.mulf %46, %47 : vector<1x32xf32>
    %cst_16 = arith.constant 9.99999974E-6 : f32
    %49 = vector.broadcast %cst_16 : f32 to vector<1x32xf32>
    %50 = arith.addf %48, %49 : vector<1x32xf32>
    %51 = math.rsqrt %50 : vector<1x32xf32>
    %cst_17 = arith.constant 9.99999974E-6 : f32
    %52 = vector.broadcast %cst_17 : f32 to vector<1x32xf32>
    %53 = arith.addf %48, %52 : vector<1x32xf32>
    %54 = arith.mulf %53, %51 : vector<1x32xf32>
    %c0_18 = arith.constant 0 : index
    %c0_19 = arith.constant 0 : index
    %55 = vector.load %arg3[%c0_18, %c0_19] : memref<1x32xf32, #tpu.memory_space<vmem>>, vector<1x32xf32>
    %56 = arith.mulf %51, %55 : vector<1x32xf32>
    %c0_20 = arith.constant 0 : index
    %c0_21 = arith.constant 0 : index
    %57 = vector.load %arg4[%c0_20, %c0_21] : memref<1x32xf32, #tpu.memory_space<vmem>>, vector<1x32xf32>
    %58 = vector.shape_cast %56 : vector<1x32xf32> to vector<1x1x32xf32>
    %59 = arith.mulf %43, %58 : vector<1x1x32xf32>
    %60 = vector.shape_cast %57 : vector<1x32xf32> to vector<1x1x32xf32>
    %61 = arith.addf %59, %60 : vector<1x1x32xf32>
    %c0_22 = arith.constant 0 : index
    %c0_23 = arith.constant 0 : index
    %c0_24 = arith.constant 0 : index
    %62 = vector.load %arg5[%c0_22, %c0_23, %c0_24] : memref<1x1x32xf32, #tpu.memory_space<vmem>>, vector<1x1x32xf32>
    tpu.vector_store %arg5[%c0_22, %c0_23, %c0_24], %61 {strides = array<i32>} : memref<1x1x32xf32, #tpu.memory_space<vmem>>, vector<1x1x32xf32>,
    %63 = vector.extract_strided_slice %41 {offsets = [0, 0], sizes = [1, 4], strides = [1, 1]} : vector<1x32xf32> to vector<1x4xf32>
    %64 = vector.extract_strided_slice %54 {offsets = [0, 0], sizes = [1, 4], strides = [1, 1]} : vector<1x32xf32> to vector<1x4xf32>
    %65 = vector.shape_cast %63 : vector<1x4xf32> to vector<1x1x4xf32>
    %c0_25 = arith.constant 0 : index
    %c0_26 = arith.constant 0 : index
    %c0_27 = arith.constant 0 : index
    %66 = vector.load %arg6[%c0_25, %c0_26, %c0_27] : memref<1x1x4xf32, #tpu.memory_space<vmem>>, vector<1x1x4xf32>
    tpu.vector_store %arg6[%c0_25, %c0_26, %c0_27], %65 {strides = array<i32>} : memref<1x1x4xf32, #tpu.memory_space<vmem>>, vector<1x1x4xf32>,
    %67 = vector.shape_cast %64 : vector<1x4xf32> to vector<1x1x4xf32>
    %c0_28 = arith.constant 0 : index
    %c0_29 = arith.constant 0 : index
    %c0_30 = arith.constant 0 : index
    %68 = vector.load %arg7[%c0_28, %c0_29, %c0_30] : memref<1x1x4xf32, #tpu.memory_space<vmem>>, vector<1x1x4xf32>
    tpu.vector_store %arg7[%c0_28, %c0_29, %c0_30], %67 {strides = array<i32>} : memref<1x1x4xf32, #tpu.memory_space<vmem>>, vector<1x1x4xf32>,
    return
  }
  func.func @transform_0(%arg0: i32, %arg1: i32) -> (i32, i32, i32) {
    %c0_i32 = arith.constant 0 : i32
    %c0_i32_0 = arith.constant 0 : i32
    return %arg0, %c0_i32, %arg1 : i32, i32, i32
  }
  func.func @transform_1(%arg0: i32, %arg1: i32) -> (i32, i32) {
    %c0_i32 = arith.constant 0 : i32
    %c0_i32_0 = arith.constant 0 : i32
    return %c0_i32, %arg1 : i32, i32
  }
  func.func @transform_2(%arg0: i32, %arg1: i32) -> (i32, i32) {
    %c0_i32 = arith.constant 0 : i32
    %c0_i32_0 = arith.constant 0 : i32
    return %c0_i32, %arg1 : i32, i32
  }
  func.func @transform_3(%arg0: i32, %arg1: i32) -> (i32, i32, i32) {
    %c0_i32 = arith.constant 0 : i32
    %c0_i32_0 = arith.constant 0 : i32
    return %arg0, %c0_i32, %arg1 : i32, i32, i32
  }
  func.func @transform_4(%arg0: i32, %arg1: i32) -> (i32, i32, i32) {
    %c0_i32 = arith.constant 0 : i32
    %c0_i32_0 = arith.constant 0 : i32
    return %arg0, %c0_i32, %arg1 : i32, i32, i32
  }
  func.func @transform_5(%arg0: i32, %arg1: i32) -> (i32, i32, i32) {
    %c0_i32 = arith.constant 0 : i32
    %c0_i32_0 = arith.constant 0 : i32
    return %arg0, %c0_i32, %arg1 : i32, i32, i32
  }
}

</mosaic_0001>

<llo_original>
// kernel: tpu_custom_call.1
$region0: #{tpu_custom_call.1}
  #allocation0 [shape = 'u32[]', space=smem, size = 0x4, offset = 0x4, fixed_abs, tag = 'smem constant byte address 0x4 - core index']
  #allocation1 [shape = 'u32[144,128]{1,0:T(1,128)}', space=vmem, size = 0x12000, scoped, tag = 'internal scratch']
  %s0 = inlined_call_operand.hbm [shape: f32[2,1,32], index: 0, kind: input, shape index: {}]
  %s1 = inlined_call_operand.vmem [shape: f32[1,32], index: 1, kind: input, shape index: {}]
  %s2 = inlined_call_operand.vmem [shape: f32[1,32], index: 2, kind: input, shape index: {}]
  %s3 = inlined_call_operand.hbm [shape: f32[2,1,32], index: 3, kind: output, shape index: {0}]
  %s4 = inlined_call_operand.hbm [shape: f32[2,1,4], index: 4, kind: output, shape index: {1}]
  %s5 = inlined_call_operand.hbm [shape: f32[2,1,4], index: 5, kind: output, shape index: {2}]
  %6 = xla_tuple %s3, %s4, %s5
  %s7 = sld [smem:[#allocation0]]
  $region65: #{tpu_custom_call.1} parent=0
    _
  %s9 = ssub.s32 1, %s7
  %s10 = scalar_select 0, %s9, %s7
  $region1: #{tpu_custom_call.1} parent=0
    #allocation2 [shape = 'u8[1024]{0}', space=vmem, size = 0x400, scoped, tag = 'input window, operand 0']
    #allocation3 [shape = 's32[2]{0}', space=sflag, size = 0x8, scoped, tag = 'scoped memory for tpu_custom_call.1']
    #allocation4 [shape = 's32[2]{0}', space=sflag, size = 0x8, scoped, tag = 'scoped memory for tpu_custom_call.1']
    #allocation5 [shape = 'u8[1024]{0}', space=vmem, size = 0x400, scoped, tag = 'output window, operand 0']
    #allocation6 [shape = 'u8[1024]{0}', space=vmem, size = 0x400, scoped, tag = 'output window, operand 1']
    #allocation7 [shape = 's32[2]{0}', space=sflag, size = 0x8, scoped, tag = 'scoped memory for tpu_custom_call.1']
    #allocation8 [shape = 'u8[1024]{0}', space=vmem, size = 0x400, scoped, tag = 'output window, operand 2']
    %11 = vsyncpa [#allocation3], 0
    %s12 = scalar_lea.sflag [#allocation3], 1
    %13 = vsyncpa %s12, 0
    %14 = vsyncpa [#allocation4], 0
    %s15 = scalar_lea.sflag [#allocation4], 1
    %16 = vsyncpa %s15, 0
    %17 = vsyncpa [#allocation7], 0
    %s18 = scalar_lea.sflag [#allocation7], 1
    %19 = vsyncpa %s18, 0
    loop: start=0, step=1, limit=4
    $region2: #{tpu_custom_call.1} parent=1 // loop_pre_header
      _
    $region3: #{tpu_custom_call.1} parent=1 // loop_header
      %s21 = sphi 0, %s25
      %p22 = scmp.ge.s32.totalorder %s21, 4
      %s28 = sphi 0, %s40
      %s29 = sphi 0, %s36
      %s30 = sphi 0, %s28
      %s31 = sphi 0, %s29
      %s32 = sphi 0, %s30
      %s33 = sphi 0, %s31
      %s45 = sphi 0, %s47
      %s48 = sphi 0, %s45
      %s49 = sphi 0, %s48
      %s65 = sphi 0, %s49
      %s71 = sphi 0, %s73
      %s74 = sphi 0, %s71
      %s75 = sphi 0, %s74
      %s91 = sphi 0, %s75
      %s97 = sphi 0, %s99
      %s100 = sphi 0, %s97
      %s101 = sphi 0, %s100
      %s117 = sphi 0, %s101
      %s125 = sphi 0, %s127
      %s128 = sphi 0, %s125
      %s129 = sphi 0, %s128
      %s145 = sphi 0, %s129
      %s153 = sphi 0, %s155
      %s156 = sphi 0, %s153
      %s157 = sphi 0, %s156
      %s173 = sphi 0, %s157
      %s181 = sphi 0, %s183
      %s184 = sphi 0, %s181
      %s185 = sphi 0, %s184
      %s201 = sphi 0, %s185
    $region4: #{tpu_custom_call.1} parent=1 // loop_header_branch
      %24 = sbr.rel (%p22) target = $region8
    $region5: #{tpu_custom_call.1} parent=1 // loop_body
      %s26 = ssub.s32 %s21, 1
      %s27 = ssub.s32 %s21, 2
      %s34 = sadd.s32 1, %s29
      %p35 = scmp.ge.s32.totalorder %s34, 1
      %s36 = scalar_select %p35, 0, %s34
      %s37 = sadd.s32 1, %s28
      %s38 = scalar_select %p35, %s37, %s28
      %p39 = scmp.ge.s32.totalorder %s38, 2
      %s40 = scalar_select %p39, 0, %s38
      %s41 = ssub.s32 %s28, %s40
      %s42 = ssub.s32 %s29, %s36
      %s43 = sor.u32 %s41, %s42
      %p44 = scmp.eq.s32.totalorder %s43, 0
      %s46 = sadd.s32 %s45, 1
      %s47 = scalar_select %p44, %s45, %s46
      %p50 = pneg %p44
      %p51 = scmp.eq.s32.totalorder %s21, 1
      %p52 = por %p50, %p51
      %p53 = scmp.ne.s32.totalorder %s45, %s48
      %p54 = scmp.eq.s32.totalorder %s21, 0
      %p55 = por %p53, %p54
      %p56 = scmp.ne.s32.totalorder %s45, %s48
      %p57 = scmp.eq.s32.totalorder %s26, 1
      %p58 = por %p56, %p57
      %p59 = scmp.ne.s32.totalorder %s48, %s49
      %p60 = scmp.eq.s32.totalorder %s26, 0
      %p61 = por %p59, %p60
      %p62 = scmp.ne.s32.totalorder %s48, %s49
      %p63 = scmp.eq.s32.totalorder %s27, 1
      %p64 = por %p62, %p63
      %p66 = scmp.ne.s32.totalorder %s49, %s65
      %p67 = scmp.eq.s32.totalorder %s27, 0
      %p68 = por %p66, %p67
      %s69 = ssub.s32 %s29, %s36
      %p70 = scmp.eq.s32.totalorder %s69, 0
      %s72 = sadd.s32 %s71, 1
      %s73 = scalar_select %p70, %s71, %s72
      %p76 = pneg %p70
      %p77 = scmp.eq.s32.totalorder %s21, 1
      %p78 = por %p76, %p77
      %p79 = scmp.ne.s32.totalorder %s71, %s74
      %p80 = scmp.eq.s32.totalorder %s21, 0
      %p81 = por %p79, %p80
      %p82 = scmp.ne.s32.totalorder %s71, %s74
      %p83 = scmp.eq.s32.totalorder %s26, 1
      %p84 = por %p82, %p83
      %p85 = scmp.ne.s32.totalorder %s74, %s75
      %p86 = scmp.eq.s32.totalorder %s26, 0
      %p87 = por %p85, %p86
      %p88 = scmp.ne.s32.totalorder %s74, %s75
      %p89 = scmp.eq.s32.totalorder %s27, 1
      %p90 = por %p88, %p89
      %p92 = scmp.ne.s32.totalorder %s75, %s91
      %p93 = scmp.eq.s32.totalorder %s27, 0
      %p94 = por %p92, %p93
      %s95 = ssub.s32 %s29, %s36
      %p96 = scmp.eq.s32.totalorder %s95, 0
      %s98 = sadd.s32 %s97, 1
      %s99 = scalar_select %p96, %s97, %s98
      %p102 = pneg %p96
      %p103 = scmp.eq.s32.totalorder %s21, 1
      %p104 = por %p102, %p103
      %p105 = scmp.ne.s32.totalorder %s97, %s100
      %p106 = scmp.eq.s32.totalorder %s21, 0
      %p107 = por %p105, %p106
      %p108 = scmp.ne.s32.totalorder %s97, %s100
      %p109 = scmp.eq.s32.totalorder %s26, 1
      %p110 = por %p108, %p109
      %p111 = scmp.ne.s32.totalorder %s100, %s101
      %p112 = scmp.eq.s32.totalorder %s26, 0
      %p113 = por %p111, %p112
      %p114 = scmp.ne.s32.totalorder %s100, %s101
      %p115 = scmp.eq.s32.totalorder %s27, 1
      %p116 = por %p114, %p115
      %p118 = scmp.ne.s32.totalorder %s101, %s117
      %p119 = scmp.eq.s32.totalorder %s27, 0
      %p120 = por %p118, %p119
      %s121 = ssub.s32 %s28, %s40
      %s122 = ssub.s32 %s29, %s36
      %s123 = sor.u32 %s121, %s122
      %p124 = scmp.eq.s32.totalorder %s123, 0
      %s126 = sadd.s32 %s125, 1
      %s127 = scalar_select %p124, %s125, %s126
      %p130 = pneg %p124
      %p131 = scmp.eq.s32.totalorder %s21, 1
      %p132 = por %p130, %p131
      %p133 = scmp.ne.s32.totalorder %s125, %s128
      %p134 = scmp.eq.s32.totalorder %s21, 0
      %p135 = por %p133, %p134
      %p136 = scmp.ne.s32.totalorder %s125, %s128
      %p137 = scmp.eq.s32.totalorder %s26, 1
      %p138 = por %p136, %p137
      %p139 = scmp.ne.s32.totalorder %s128, %s129
      %p140 = scmp.eq.s32.totalorder %s26, 0
      %p141 = por %p139, %p140
      %p142 = scmp.ne.s32.totalorder %s128, %s129
      %p143 = scmp.eq.s32.totalorder %s27, 1
      %p144 = por %p142, %p143
      %p146 = scmp.ne.s32.totalorder %s129, %s145
      %p147 = scmp.eq.s32.totalorder %s27, 0
      %p148 = por %p146, %p147
      %s149 = ssub.s32 %s28, %s40
      %s150 = ssub.s32 %s29, %s36
      %s151 = sor.u32 %s149, %s150
      %p152 = scmp.eq.s32.totalorder %s151, 0
      %s154 = sadd.s32 %s153, 1
      %s155 = scalar_select %p152, %s153, %s154
      %p158 = pneg %p152
      %p159 = scmp.eq.s32.totalorder %s21, 1
      %p160 = por %p158, %p159
      %p161 = scmp.ne.s32.totalorder %s153, %s156
      %p162 = scmp.eq.s32.totalorder %s21, 0
      %p163 = por %p161, %p162
      %p164 = scmp.ne.s32.totalorder %s153, %s156
      %p165 = scmp.eq.s32.totalorder %s26, 1
      %p166 = por %p164, %p165
      %p167 = scmp.ne.s32.totalorder %s156, %s157
      %p168 = scmp.eq.s32.totalorder %s26, 0
      %p169 = por %p167, %p168
      %p170 = scmp.ne.s32.totalorder %s156, %s157
      %p171 = scmp.eq.s32.totalorder %s27, 1
      %p172 = por %p170, %p171
      %p174 = scmp.ne.s32.totalorder %s157, %s173
      %p175 = scmp.eq.s32.totalorder %s27, 0
      %p176 = por %p174, %p175
      %s177 = ssub.s32 %s28, %s40
      %s178 = ssub.s32 %s29, %s36
      %s179 = sor.u32 %s177, %s178
      %p180 = scmp.eq.s32.totalorder %s179, 0
      %s182 = sadd.s32 %s181, 1
      %s183 = scalar_select %p180, %s181, %s182
      %p186 = pneg %p180
      %p187 = scmp.eq.s32.totalorder %s21, 1
      %p188 = por %p186, %p187
      %p189 = scmp.ne.s32.totalorder %s181, %s184
      %p190 = scmp.eq.s32.totalorder %s21, 0
      %p191 = por %p189, %p190
      %p192 = scmp.ne.s32.totalorder %s181, %s184
      %p193 = scmp.eq.s32.totalorder %s26, 1
      %p194 = por %p192, %p193
      %p195 = scmp.ne.s32.totalorder %s184, %s185
      %p196 = scmp.eq.s32.totalorder %s26, 0
      %p197 = por %p195, %p196
      %p198 = scmp.ne.s32.totalorder %s184, %s185
      %p199 = scmp.eq.s32.totalorder %s27, 1
      %p200 = por %p198, %p199
      %p202 = scmp.ne.s32.totalorder %s185, %s201
      %p203 = scmp.eq.s32.totalorder %s27, 0
      %p204 = por %p202, %p203
      %p205 = scmp.le.s32.totalorder 1, %s21
      %p206 = scmp.lt.s32.totalorder %s21, 3
      %p207 = pnand %p205, %p206
      %p208 = pneg %p207
      // Predicated region
      $region9: #{tpu_custom_call.1} parent=5 // pred_check
        _
      $region10: #{tpu_custom_call.1} parent=5 // pred_check_branch
        %210 = sbr.rel (%p207) target = $region12
      $region11: #{tpu_custom_call.1} parent=5 // pred_region
        %s211 = ssub.s32 %s21, 1
        // Predicated region
        $region13: #{tpu_custom_call.1} parent=11 // pred_check
          %p212 = pneg %p87
        $region14: #{tpu_custom_call.1} parent=11 // pred_check_branch
          %214 = sbr.rel (%p212) target = $region16
        $region15: #{tpu_custom_call.1} parent=11 // pred_region
          %p215 = scmp.lt.s32.totalorder %s31, 0
          %s216 = scalar_select %p215, %s31, 0
          %s217 = scalar_lea.vmem %s1, %s216
        $region16: #{tpu_custom_call.1} parent=11 // pred_fallthru
          _
        // Predicated region
        $region17: #{tpu_custom_call.1} parent=11 // pred_check
          %p218 = pneg %p113
        $region18: #{tpu_custom_call.1} parent=11 // pred_check_branch
          %220 = sbr.rel (%p218) target = $region20
        $region19: #{tpu_custom_call.1} parent=11 // pred_region
          %p221 = scmp.lt.s32.totalorder %s31, 0
          %s222 = scalar_select %p221, %s31, 0
          %s223 = scalar_lea.vmem %s2, %s222
        $region20: #{tpu_custom_call.1} parent=11 // pred_fallthru
          _
      $region12: #{tpu_custom_call.1} parent=5 // pred_fallthru
        _
      %p224 = scmp.lt.s32.totalorder %s21, 2
      // Predicated region
      $region21: #{tpu_custom_call.1} parent=5 // pred_check
        %p225 = pneg %p224
      $region22: #{tpu_custom_call.1} parent=5 // pred_check_branch
        %227 = sbr.rel (%p225) target = $region24
      $region23: #{tpu_custom_call.1} parent=5 // pred_region
        // Predicated region
        $region25: #{tpu_custom_call.1} parent=23 // pred_check
          %p228 = pneg %p55
        $region26: #{tpu_custom_call.1} parent=23 // pred_check_branch
          %230 = sbr.rel (%p228) target = $region28
        $region27: #{tpu_custom_call.1} parent=23 // pred_region
          %s231 = sand.u32 %s45, 1
          %s232 = scalar_lea.sflag [#allocation3], %s231
          %s233 = sand.u32 %s45, 1
          %s234 = scalar_lea.vmem [#allocation2], %s233
          %s236 = ssub.s32 16, 16
          %237 = vsyncadd %s232, %s236
          %s238 = sadd.s32 %s29, %s28
          %s239 = smul.addr %s238, 16
          %s240 = scalar_lea.hbm %s0, %s239
          %s242 = sshll.u32 %s234, 4
          %s243 = int_to_ptr.vmem [resolvable:$true] %s242
          %245 = dma.hbm_to_vmem [thread:$0]  %s240, 16, %s243, %s232
        $region28: #{tpu_custom_call.1} parent=23 // pred_fallthru
          _
      $region24: #{tpu_custom_call.1} parent=5 // pred_fallthru
        _
      %p246 = scmp.le.s32.totalorder 1, %s21
      %p247 = scmp.lt.s32.totalorder %s21, 3
      %p248 = pnand %p246, %p247
      %p249 = pneg %p248
      // Predicated region
      $region29: #{tpu_custom_call.1} parent=5 // pred_check
        _
      $region30: #{tpu_custom_call.1} parent=5 // pred_check_branch
        %251 = sbr.rel (%p248) target = $region32
      $region31: #{tpu_custom_call.1} parent=5 // pred_region
        %s252 = ssub.s32 %s21, 1
        %s253 = sand.u32 %s48, 1
        %s254 = scalar_lea.sflag [#allocation3], %s253
        %s255 = sand.u32 %s48, 1
        %s256 = scalar_lea.vmem [#allocation2], %s255
        // Predicated region
        $region33: #{tpu_custom_call.1} parent=31 // pred_check
          %p257 = pneg %p61
        $region34: #{tpu_custom_call.1} parent=31 // pred_check_branch
          %259 = sbr.rel (%p257) target = $region36
        $region35: #{tpu_custom_call.1} parent=31 // pred_region
          %260 = dma.done %s254, 16
        $region36: #{tpu_custom_call.1} parent=31 // pred_fallthru
          _
        %s261 = sand.u32 %s48, 1
        %s262 = scalar_lea.sflag [#allocation3], %s261
        %s263 = sand.u32 %s48, 1
        %s264 = scalar_lea.vmem [#allocation2], %s263
        %p265 = pneg %p61
        %p266 = pneg %p58
        %p267 = scmp.lt.s32.totalorder %s31, 0
        %s268 = scalar_select %p267, %s31, 0
        %s269 = scalar_lea.vmem %s1, %s268
        %p270 = pneg %p87
        %p271 = pneg %p84
        %p272 = scmp.lt.s32.totalorder %s31, 0
        %s273 = scalar_select %p272, %s31, 0
        %s274 = scalar_lea.vmem %s2, %s273
        %p275 = pneg %p113
        %p276 = pneg %p110
        %p277 = pneg %p141
        %p278 = pneg %p138
        %s279 = sand.u32 %s128, 1
        %s280 = scalar_lea.sflag [#allocation4], %s279
        %s281 = sand.u32 %s128, 1
        %s282 = scalar_lea.vmem [#allocation5], %s281
        %p283 = pneg %p169
        %p284 = pneg %p166
        %s285 = sand.u32 %s26, 1
        %s286 = scalar_lea.sflag [#allocation7], %s285
        %s287 = sand.u32 %s156, 1
        %s288 = scalar_lea.vmem [#allocation6], %s287
        %p289 = pneg %p197
        %p290 = pneg %p194
        %s291 = sand.u32 %s26, 1
        %s292 = scalar_lea.sflag [#allocation7], %s291
        %s293 = sand.u32 %s184, 1
        %s294 = scalar_lea.vmem [#allocation8], %s293
        %p295 = scmp.lt.s32.totalorder %s31, 0
        %s296 = scalar_select %p295, %s31, 0
        %s297 = scalar_lea.vmem %s1, %s296
        %p298 = scmp.lt.s32.totalorder %s31, 0
        %s299 = scalar_select %p298, %s31, 0
        %s300 = scalar_lea.vmem %s2, %s299
        %v301 = vld [vmem:[%s256] sm:$0x1]
        %v302 = vadd.f32 %v301, 0.0
        %v303 = vlaneseq
        %v304 = vshrl.u32 %v303, 7
        %v305 = vadd.s32 %v304, 8
        %v306 = vadd.s32 %v304, 16
        %v307 = vadd.s32 %v304, 24
        %v308 = vlaneseq
        %v309 = vand.u32 %v308, 127
        %vm310 = vcmp.lt.s32.totalorder %v304, 0
        %v311 = vsub.s32 0, %v304
        %v312 = vsel %vm310, %v311, %v304
        %v313 = vshrl.u32 %v312, 2
        %v314 = vand.u32 %v312, 3
        %v315 = vsub.s32 0, %v314
        %v316 = vsel %vm310, %v315, %v314
        %vm317 = vcmp.lt.s32.totalorder %v305, 0
        %v318 = vsub.s32 0, %v305
        %v319 = vsel %vm317, %v318, %v305
        %v320 = vshrl.u32 %v319, 2
        %v321 = vand.u32 %v319, 3
        %v322 = vsub.s32 0, %v321
        %v323 = vsel %vm317, %v322, %v321
        %vm324 = vcmp.lt.s32.totalorder %v306, 0
        %v325 = vsub.s32 0, %v306
        %v326 = vsel %vm324, %v325, %v306
        %v327 = vshrl.u32 %v326, 2
        %v328 = vand.u32 %v326, 3
        %v329 = vsub.s32 0, %v328
        %v330 = vsel %vm324, %v329, %v328
        %vm331 = vcmp.lt.s32.totalorder %v307, 0
        %v332 = vsub.s32 0, %v307
        %v333 = vsel %vm331, %v332, %v307
        %v334 = vshrl.u32 %v333, 2
        %v335 = vand.u32 %v333, 3
        %v336 = vsub.s32 0, %v335
        %v337 = vsel %vm331, %v336, %v335
        %vm338 = vcmp.ne.s32.totalorder %v316, 0
        %vm339 = vcmp.ne.s32.totalorder %v323, 0
        %vm340 = vcmp.ne.s32.totalorder %v330, 0
        %vm341 = vcmp.ne.s32.totalorder %v337, 0
        %vm342 = vcmp.lt.s32.totalorder %v316, 0
        %vm343 = vcmp.lt.s32.totalorder %v323, 0
        %vm344 = vcmp.lt.s32.totalorder %v330, 0
        %vm345 = vcmp.lt.s32.totalorder %v337, 0
        %vm346 = vmand %vm342, %vm338
        %vm347 = vmand %vm343, %vm339
        %vm348 = vmand %vm344, %vm340
        %vm349 = vmand %vm345, %vm341
        %v350 = vadd.s32 %v316, 4
        %v351 = vadd.s32 %v323, 4
        %v352 = vadd.s32 %v330, 4
        %v353 = vadd.s32 %v337, 4
        %v354 = vsel %vm346, %v350, %v316
        %v355 = vsel %vm347, %v351, %v323
        %v356 = vsel %vm348, %v352, %v330
        %v357 = vsel %vm349, %v353, %v337
        %vm358 = vcmp.lt.s32.totalorder %v309, 0
        %v359 = vsub.s32 0, %v309
        %v360 = vsel %vm358, %v359, %v309
        %v361 = vshrl.u32 %v360, 2
        %v362 = vand.u32 %v360, 3
        %v363 = vsub.s32 0, %v362
        %v364 = vsel %vm358, %v363, %v362
        %vm365 = vcmp.ne.s32.totalorder %v364, 0
        %vm366 = vcmp.lt.s32.totalorder %v364, 0
        %vm367 = vmand %vm366, %vm365
        %v368 = vadd.s32 %v364, 4
        %v369 = vsel %vm367, %v368, %v364
        %vm370 = vcmp.eq.s32.totalorder %v354, %v369
        %vm371 = vcmp.eq.s32.totalorder %v355, %v369
        %vm372 = vcmp.eq.s32.totalorder %v356, %v369
        %vm373 = vcmp.eq.s32.totalorder %v357, %v369
        %v374 = vsel %vm370, 1, 0
        %v375 = vsel %vm371, 1, 0
        %v376 = vsel %vm372, 1, 0
        %v377 = vsel %vm373, 1, 0
        %v378 = vcvt.s32.f32 %v374
        %v379 = vcvt.s32.f32 %v375
        %v380 = vcvt.s32.f32 %v376
        %v381 = vcvt.s32.f32 %v377
        %vm382 = vcmask 261120
        %v384 = vsel %vm382, %v302, 0
        %386 = vmatprep.subr.mxu0 0.0
        %387 = vmatpush1.msra.mxu0 0.0
        %388 = vmatprep.subr.mxu0 0.0
        %389 = vmatpush1.msra.mxu0 0.0
        %390 = vmatprep.subr.mxu0 0.0
        %391 = vmatpush1.msra.mxu0 0.0
        %392 = vmatprep.subr.mxu0 0.0
        %393 = vmatpush1.msra.mxu0 0.0
        %394 = vmatprep.subr.mxu0 0.0
        %395 = vmatpush1.msra.mxu0 0.0
        %396 = vmatprep.subr.mxu0 0.0
        %397 = vmatpush1.msra.mxu0 0.0
        %398 = vmatprep.subr.mxu0 0.0
        %399 = vmatpush1.msra.mxu0 0.0
        %400 = vmatprep.subr.mxu0 0.0
        %401 = vmatpush1.msra.mxu0 0.0
        %402 = vmatprep.subr.mxu0 0.0
        %403 = vmatpush1.msra.mxu0 0.0
        %404 = vmatprep.subr.mxu0 0.0
        %405 = vmatpush1.msra.mxu0 0.0
        %406 = vmatprep.subr.mxu0 0.0
        %407 = vmatpush1.msra.mxu0 0.0
        %408 = vmatprep.subr.mxu0 0.0
        %409 = vmatpush1.msra.mxu0 0.0
        %410 = vmatprep.subr.mxu0 0.0
        %411 = vmatpush1.msra.mxu0 %v381
        %412 = vmatprep.subr.mxu0 0.0
        %413 = vmatpush1.msra.mxu0 %v380
        %414 = vmatprep.subr.mxu0 0.0
        %415 = vmatpush1.msra.mxu0 %v379
        %416 = vmatprep.subr.mxu0 0.0
        %417 = vmatpush1.msra.mxu0 %v378
        %418 = vmatprep.subr.mxu0 0.0
        %419 = vmatpush2.msra.mxu0 0.0
        %420 = vmatprep.subr.mxu0 0.0
        %421 = vmatpush2.msra.mxu0 0.0
        %422 = vmatprep.subr.mxu0 0.0
        %423 = vmatpush2.msra.mxu0 0.0
        %424 = vmatprep.subr.mxu0 0.0
        %425 = vmatpush2.msra.mxu0 0.0
        %426 = vmatprep.subr.mxu0 0.0
        %427 = vmatpush2.msra.mxu0 0.0
        %428 = vmatprep.subr.mxu0 0.0
        %429 = vmatpush2.msra.mxu0 0.0
        %430 = vmatprep.subr.mxu0 0.0
        %431 = vmatpush2.msra.mxu0 0.0
        %432 = vmatprep.subr.mxu0 0.0
        %433 = vmatpush2.msra.mxu0 0.0
        %434 = vmatprep.subr.mxu0 0.0
        %435 = vmatpush2.msra.mxu0 0.0
        %436 = vmatprep.subr.mxu0 0.0
        %437 = vmatpush2.msra.mxu0 0.0
        %438 = vmatprep.subr.mxu0 0.0
        %439 = vmatpush2.msra.mxu0 0.0
        %440 = vmatprep.subr.mxu0 0.0
        %441 = vmatpush2.msra.mxu0 0.0
        %442 = vmatprep.subr.mxu0 0.0
        %443 = vmatpush2.msra.mxu0 0.0
        %444 = vmatprep.subr.mxu0 0.0
        %445 = vmatpush2.msra.mxu0 0.0
        %446 = vmatprep.subr.mxu0 0.0
        %447 = vmatpush2.msra.mxu0 0.0
        %448 = vmatprep.subr.mxu0 0.0
        %449 = vmatpush2.msra.mxu0 0.0
        %450 = vmatprep.mubr.f32.mxu0 0.0
        %451 = vmatmul.mubr.f32.gmra.mxu0 %v384
        %v452 = vpop.f32.mrf.mxu0
        %v453 = vadd.f32 0.0, %v452
        %v454 = vpop.f32.mrf.mxu0
        %455 = vdwg.mxu0
        %v456 = vmul.f32 %v453, 0.125
        %v457 = vsub.f32 %v301, %v456
        %v458 = vmul.f32 %v457, %v457
        %v459 = vadd.f32 %v458, 0.0
        %v461 = vsel %vm382, %v459, 0
        %463 = vmatprep.subr.mxu0 0.0
        %464 = vmatpush1.msra.mxu0 0.0
        %465 = vmatprep.subr.mxu0 0.0
        %466 = vmatpush1.msra.mxu0 0.0
        %467 = vmatprep.subr.mxu0 0.0
        %468 = vmatpush1.msra.mxu0 0.0
        %469 = vmatprep.subr.mxu0 0.0
        %470 = vmatpush1.msra.mxu0 0.0
        %471 = vmatprep.subr.mxu0 0.0
        %472 = vmatpush1.msra.mxu0 0.0
        %473 = vmatprep.subr.mxu0 0.0
        %474 = vmatpush1.msra.mxu0 0.0
        %475 = vmatprep.subr.mxu0 0.0
        %476 = vmatpush1.msra.mxu0 0.0
        %477 = vmatprep.subr.mxu0 0.0
        %478 = vmatpush1.msra.mxu0 0.0
        %479 = vmatprep.subr.mxu0 0.0
        %480 = vmatpush1.msra.mxu0 0.0
        %481 = vmatprep.subr.mxu0 0.0
        %482 = vmatpush1.msra.mxu0 0.0
        %483 = vmatprep.subr.mxu0 0.0
        %484 = vmatpush1.msra.mxu0 0.0
        %485 = vmatprep.subr.mxu0 0.0
        %486 = vmatpush1.msra.mxu0 0.0
        %487 = vmatprep.subr.mxu0 0.0
        %488 = vmatpush1.msra.mxu0 %v381
        %489 = vmatprep.subr.mxu0 0.0
        %490 = vmatpush1.msra.mxu0 %v380
        %491 = vmatprep.subr.mxu0 0.0
        %492 = vmatpush1.msra.mxu0 %v379
        %493 = vmatprep.subr.mxu0 0.0
        %494 = vmatpush1.msra.mxu0 %v378
        %495 = vmatprep.subr.mxu0 0.0
        %496 = vmatpush2.msra.mxu0 0.0
        %497 = vmatprep.subr.mxu0 0.0
        %498 = vmatpush2.msra.mxu0 0.0
        %499 = vmatprep.subr.mxu0 0.0
        %500 = vmatpush2.msra.mxu0 0.0
        %501 = vmatprep.subr.mxu0 0.0
        %502 = vmatpush2.msra.mxu0 0.0
        %503 = vmatprep.subr.mxu0 0.0
        %504 = vmatpush2.msra.mxu0 0.0
        %505 = vmatprep.subr.mxu0 0.0
        %506 = vmatpush2.msra.mxu0 0.0
        %507 = vmatprep.subr.mxu0 0.0
        %508 = vmatpush2.msra.mxu0 0.0
        %509 = vmatprep.subr.mxu0 0.0
        %510 = vmatpush2.msra.mxu0 0.0
        %511 = vmatprep.subr.mxu0 0.0
        %512 = vmatpush2.msra.mxu0 0.0
        %513 = vmatprep.subr.mxu0 0.0
        %514 = vmatpush2.msra.mxu0 0.0
        %515 = vmatprep.subr.mxu0 0.0
        %516 = vmatpush2.msra.mxu0 0.0
        %517 = vmatprep.subr.mxu0 0.0
        %518 = vmatpush2.msra.mxu0 0.0
        %519 = vmatprep.subr.mxu0 0.0
        %520 = vmatpush2.msra.mxu0 0.0
        %521 = vmatprep.subr.mxu0 0.0
        %522 = vmatpush2.msra.mxu0 0.0
        %523 = vmatprep.subr.mxu0 0.0
        %524 = vmatpush2.msra.mxu0 0.0
        %525 = vmatprep.subr.mxu0 0.0
        %526 = vmatpush2.msra.mxu0 0.0
        %527 = vmatprep.mubr.f32.mxu0 0.0
        %528 = vmatmul.mubr.f32.gmra.mxu0 %v461
        %v529 = vpop.f32.mrf.mxu0
        %v530 = vadd.f32 0.0, %v529
        %v531 = vpop.f32.mrf.mxu0
        %532 = vdwg.mxu0
        %v533 = vmul.f32 %v530, 0.125
        %v534 = vadd.f32 %v533, 1e-05
        %v535 = vrsqrt.pop %v534
        %v536 = vmul.f32 %v534, %v535
        %v537 = vld [vmem:[%s297] sm:$0x1]
        %v538 = vmul.f32 %v535, %v537
        %v539 = vld [vmem:[%s300] sm:$0x1]
        %v540 = vmul.f32 %v457, %v538
        %v541 = vadd.f32 %v540, %v539
        %vm542 = vcmask 253952
        %543 = vst.msk [vmem:[%s282] sm:$0x1] %vm542, %v541
        %vm544 = vcmask 24576
        %545 = vst.msk [vmem:[%s288] sm:$0x1] %vm544, %v456
        %546 = vst.msk [vmem:[%s294] sm:$0x1] %vm544, %v536
        %s547 = sand.u32 %s128, 1
        %s548 = scalar_lea.sflag [#allocation4], %s547
        %s549 = sand.u32 %s128, 1
        %s550 = scalar_lea.vmem [#allocation5], %s549
        %s551 = sand.u32 %s26, 1
        %s552 = scalar_lea.sflag [#allocation7], %s551
        %s553 = sand.u32 %s156, 1
        %s554 = scalar_lea.vmem [#allocation6], %s553
        %s555 = sand.u32 %s26, 1
        %s556 = scalar_lea.sflag [#allocation7], %s555
        %s557 = sand.u32 %s184, 1
        %s558 = scalar_lea.vmem [#allocation8], %s557
        // Predicated region
        $region37: #{tpu_custom_call.1} parent=31 // pred_check
          %p559 = pneg %p138
        $region38: #{tpu_custom_call.1} parent=31 // pred_check_branch
          %561 = sbr.rel (%p559) target = $region40
        $region39: #{tpu_custom_call.1} parent=31 // pred_region
          %s563 = ssub.s32 16, 16
          %564 = vsyncadd %s548, %s563
          %s565 = sadd.s32 %s31, %s30
          %s566 = smul.addr %s565, 16
          %s567 = scalar_lea.hbm %s3, %s566
          %s569 = sshll.u32 %s550, 4
          %s570 = int_to_ptr.vmem [resolvable:$true] %s569
          %572 = dma.vmem_to_hbm [thread:$0]  %s570, 16, %s567, %s548
        $region40: #{tpu_custom_call.1} parent=31 // pred_fallthru
          _
        // Predicated region
        $region41: #{tpu_custom_call.1} parent=31 // pred_check
          %p573 = pneg %p166
        $region42: #{tpu_custom_call.1} parent=31 // pred_check_branch
          %575 = sbr.rel (%p573) target = $region44
        $region43: #{tpu_custom_call.1} parent=31 // pred_region
          %s577 = ssub.s32 16, 16
          %578 = vsyncadd %s552, %s577
          %s579 = sadd.s32 %s31, %s30
          %s580 = smul.addr %s579, 16
          %s581 = scalar_lea.hbm %s4, %s580
          %s583 = sshll.u32 %s554, 4
          %s584 = int_to_ptr.vmem [resolvable:$true] %s583
          %586 = dma.vmem_to_hbm [thread:$0]  %s584, 16, %s581, %s552
        $region44: #{tpu_custom_call.1} parent=31 // pred_fallthru
          _
        // Predicated region
        $region45: #{tpu_custom_call.1} parent=31 // pred_check
          %p587 = pneg %p194
        $region46: #{tpu_custom_call.1} parent=31 // pred_check_branch
          %589 = sbr.rel (%p587) target = $region48
        $region47: #{tpu_custom_call.1} parent=31 // pred_region
          %s591 = ssub.s32 16, 16
          %592 = vsyncadd %s556, %s591
          %s593 = sadd.s32 %s31, %s30
          %s594 = smul.addr %s593, 16
          %s595 = scalar_lea.hbm %s5, %s594
          %s597 = sshll.u32 %s558, 4
          %s598 = int_to_ptr.vmem [resolvable:$true] %s597
          %600 = dma.vmem_to_hbm [thread:$0]  %s598, 16, %s595, %s556
        $region48: #{tpu_custom_call.1} parent=31 // pred_fallthru
          _
      $region32: #{tpu_custom_call.1} parent=5 // pred_fallthru
        _
      %p601 = scmp.le.s32.totalorder 2, %s21
      // Predicated region
      $region49: #{tpu_custom_call.1} parent=5 // pred_check
        %p602 = pneg %p601
      $region50: #{tpu_custom_call.1} parent=5 // pred_check_branch
        %604 = sbr.rel (%p602) target = $region52
      $region51: #{tpu_custom_call.1} parent=5 // pred_region
        %s605 = ssub.s32 %s21, 2
        // Predicated region
        $region53: #{tpu_custom_call.1} parent=51 // pred_check
          %p606 = pneg %p144
        $region54: #{tpu_custom_call.1} parent=51 // pred_check_branch
          %608 = sbr.rel (%p606) target = $region56
        $region55: #{tpu_custom_call.1} parent=51 // pred_region
          %s609 = sand.u32 %s129, 1
          %s610 = scalar_lea.sflag [#allocation4], %s609
          %s611 = sand.u32 %s129, 1
          %s612 = scalar_lea.vmem [#allocation5], %s611
          %613 = dma.done %s610, 16
        $region56: #{tpu_custom_call.1} parent=51 // pred_fallthru
          _
        // Predicated region
        $region57: #{tpu_custom_call.1} parent=51 // pred_check
          %p614 = pneg %p172
        $region58: #{tpu_custom_call.1} parent=51 // pred_check_branch
          %616 = sbr.rel (%p614) target = $region60
        $region59: #{tpu_custom_call.1} parent=51 // pred_region
          %s617 = sand.u32 %s27, 1
          %s618 = scalar_lea.sflag [#allocation7], %s617
          %s619 = sand.u32 %s157, 1
          %s620 = scalar_lea.vmem [#allocation6], %s619
          %621 = dma.done %s618, 16
        $region60: #{tpu_custom_call.1} parent=51 // pred_fallthru
          _
        // Predicated region
        $region61: #{tpu_custom_call.1} parent=51 // pred_check
          %p622 = pneg %p200
        $region62: #{tpu_custom_call.1} parent=51 // pred_check_branch
          %624 = sbr.rel (%p622) target = $region64
        $region63: #{tpu_custom_call.1} parent=51 // pred_region
          %s625 = sand.u32 %s27, 1
          %s626 = scalar_lea.sflag [#allocation7], %s625
          %s627 = sand.u32 %s185, 1
          %s628 = scalar_lea.vmem [#allocation8], %s627
          %629 = dma.done %s626, 16
        $region64: #{tpu_custom_call.1} parent=51 // pred_fallthru
          _
      $region52: #{tpu_custom_call.1} parent=5 // pred_fallthru
        _
    $region6: #{tpu_custom_call.1} parent=1 // loop_footer
      %s25 = sadd.s32 1, %s21
    $region7: #{tpu_custom_call.1} parent=1 // loop_footer_branch
      %20 = sbr.rel target = $region3
    $region8: #{tpu_custom_call.1} parent=1 // loop_exit
      _
    %630 = vsyncpa [#allocation3], 1
    %s631 = scalar_lea.sflag [#allocation3], 1
    %632 = vsyncpa %s631, 1
    %633 = vsyncpa [#allocation4], 1
    %s634 = scalar_lea.sflag [#allocation4], 1
    %635 = vsyncpa %s634, 1
    %636 = vsyncpa [#allocation7], 1
    %s637 = scalar_lea.sflag [#allocation7], 1
    %638 = vsyncpa %s637, 1

</llo_original>
